<compile_context>
chip_gen: v7x
topology: tpu7x:2x2x1
jax: 0.10.0
libtpu: 0.0.40
codegen_flags: <defaults>
</compile_context>

<pallas_src>
import functools

import jax
import jax.numpy as jnp
from jax.experimental import pallas as pl
from jax.experimental.pallas import tpu as pltpu


def _splice_ctx_kernel(ctx_b_ref, emb_hbm, out_hbm, sem, *,
                       c_block, n_ctx, num_blocks, tail):
    # ctx_b_ref: (c_block, n_ctx, D) VMEM — learned ctx, pre-broadcast over the
    #            class block. Constant index_map -> DMA'd once, stays resident.
    # emb_hbm:   (n_cls, L, D) HBM ref, aliased with out_hbm. Unused: the
    #            prefix/suffix rows are already correct in the aliased buffer.
    # out_hbm:   (n_cls, L, D) HBM ref; only rows [1, 1+n_ctx) are written.
    del emb_hbm
    i = pl.program_id(0)
    start = pl.multiple_of(i * c_block, c_block)

    def copy(n_classes):
        cp = pltpu.make_async_copy(
            ctx_b_ref.at[pl.ds(0, n_classes)],
            out_hbm.at[pl.ds(start, n_classes), pl.ds(1, n_ctx), :],
            sem,
        )
        cp.start()
        cp.wait()

    if tail == c_block:           # n_cls divisible by c_block: single static path
        copy(c_block)
    else:
        @pl.when(i < num_blocks - 1)
        def _():
            copy(c_block)

        @pl.when(i == num_blocks - 1)
        def _():
            copy(tail)            # tail is a static Python int in (0, c_block)


def _choose_class_block(n_cls, n_ctx, d, itemsize,
                        vmem_budget_bytes=4 << 20, min_grid=8):
    """Classes per grid step: big enough to amortize per-step overhead, small
    enough to fit (double-buffered) in a VMEM budget safe on v5e/v6e/v7x, and
    leaving >= min_grid steps so a parallel grid axis can feed both v7x cores."""
    per_class = n_ctx * d * itemsize
    by_vmem = max(1, vmem_budget_bytes // (2 * per_class))
    by_grid = max(1, pl.cdiv(n_cls, min_grid))
    return int(max(1, min(n_cls, by_vmem, by_grid)))


def prompt_learner_forward(ctx, embedding, n_ctx=None, class_block=None):
    """prompts = cat([embedding[:, :1], broadcast(ctx), embedding[:, 1+n_ctx:]], -2).

    ctx:       (n_ctx, D)      learned context vectors (nn.Parameter).
    embedding: (n_cls, L, D)   token embeddings of the tokenized prompts
                               (token_prefix = embedding[:, :1],
                                token_suffix = embedding[:, 1+n_ctx:]).
    returns:   (n_cls, L, D)   assembled prompts.
    """
    if n_ctx is None:
        n_ctx = ctx.shape[0]
    n_cls, seq_len, d = embedding.shape
    assert ctx.shape == (n_ctx, d), (ctx.shape, (n_ctx, d))
    assert 1 + n_ctx <= seq_len, "context does not fit in the sequence"
    ctx = ctx.astype(embedding.dtype)  # keep dtypes consistent with the aliased buffer

    if class_block is None:
        class_block = _choose_class_block(n_cls, n_ctx, d,
                                          jnp.dtype(embedding.dtype).itemsize)
    class_block = int(min(class_block, n_cls))
    num_blocks = int(pl.cdiv(n_cls, class_block))
    tail = n_cls - (num_blocks - 1) * class_block  # static, in (0, class_block]

    # Broadcast once in the wrapper (tiny: class_block * n_ctx * D); the kernel
    # then needs no per-step broadcast and the block stays VMEM-resident.
    ctx_b = jnp.broadcast_to(ctx[None, :, :], (class_block, n_ctx, d))

    kernel = functools.partial(_splice_ctx_kernel, c_block=class_block,
                               n_ctx=n_ctx, num_blocks=num_blocks, tail=tail)

    return pl.pallas_call(
        kernel,
        out_shape=jax.ShapeDtypeStruct((n_cls, seq_len, d), embedding.dtype),
        grid_spec=pltpu.PrefetchScalarGridSpec(
            num_scalar_prefetch=0,
            grid=(num_blocks,),
            in_specs=[
                # ctx block: constant index_map -> DMA'd once, kept resident.
                pl.BlockSpec((class_block, n_ctx, d), lambda i: (0, 0, 0)),
                # full embedding: raw HBM ref, no auto-DMA (aliased to output).
                pl.BlockSpec(memory_space=pl.ANY),
            ],
            out_specs=pl.BlockSpec(memory_space=pl.ANY),
            scratch_shapes=[pltpu.SemaphoreType.DMA(())],
        ),
        input_output_aliases={1: 0},  # embedding buffer <-> prompts buffer
        compiler_params=pltpu.CompilerParams(
            dimension_semantics=("parallel",),
            vmem_limit_bytes=32 << 20,  # safe on v5e/v6e (128 MiB) and v7x (64 MiB)
        ),
    )(ctx_b, embedding)


if __name__ == "__main__":
    # Small deterministic shapes consistent with the module. D is a multiple of
    # 128 so the last dim is lane-dense (CLIP uses 512/768).
    n_cls = 16
    n_ctx = 4
    context_length = 16
    ctx_dim = 128

    key = jax.random.PRNGKey(0)
    k_ctx, k_emb, k_emb2 = jax.random.split(key, 3)

    # ctx: nn.init.normal_(std=0.02), shape (n_ctx, ctx_dim)
    ctx = 0.02 * jax.random.normal(k_ctx, (n_ctx, ctx_dim), dtype=jnp.float32)

    # Synthetic token embeddings standing in for
    # text_encoder.get_input_embeddings()(tokenized_prompts).
    # TODO(synk): tokenizer + text-encoder embedding lookup has no Pallas
    # equivalent here; deterministic synthetic embeddings are used instead.
    embedding = 0.02 * jax.random.normal(
        k_emb, (n_cls, context_length, ctx_dim), dtype=jnp.float32)

    prompts = jax.block_until_ready(prompt_learner_forward(ctx, embedding, n_ctx=n_ctx))

    # Pure-JAX reference: the torch.cat([prefix, ctx_broadcast, suffix], dim=-2) path.
    token_prefix = embedding[:, :1, :]
    token_suffix = embedding[:, 1 + n_ctx:, :]
    ctx_bcast = jnp.broadcast_to(ctx[None, :, :], (n_cls, n_ctx, ctx_dim))
    ref = jnp.concatenate([token_prefix, ctx_bcast, token_suffix], axis=-2)

    assert prompts.shape == (n_cls, context_length, ctx_dim)
    assert prompts.dtype == jnp.float32
    assert jnp.array_equal(prompts, ref)

    # Also exercise the ragged-tail path (n_cls not divisible by the class block).
    n_cls2 = 13
    emb2 = 0.02 * jax.random.normal(
        k_emb2, (n_cls2, context_length, ctx_dim), dtype=jnp.float32)
    prompts2 = jax.block_until_ready(prompt_learner_forward(ctx, emb2, n_ctx=n_ctx))
    ref2 = jnp.concatenate(
        [emb2[:, :1, :],
         jnp.broadcast_to(ctx[None, :, :], (n_cls2, n_ctx, ctx_dim)),
         emb2[:, 1 + n_ctx:, :]],
        axis=-2)
    assert jnp.array_equal(prompts2, ref2)

    # TODO(synk): 'middle'/'front' class_token_position and learned_cls paths
    # (per-class variable name_lens slicing in a host-side Python loop) are not
    # implemented in the kernel.

    print("KERNEL_OK")
</pallas_src>

<mosaic_0001>
module attributes {stable_mosaic.version = 11 : i64} {
  func.func @_splice_ctx_kernel(%arg0: i32, %arg1: memref<2x4x128xf32, #tpu.memory_space<vmem>>, %arg2: memref<16x16x128xf32, #tpu.memory_space<any>>, %arg3: memref<16x16x128xf32, #tpu.memory_space<any>>, %arg4: memref<!tpu.dma_semaphore, #tpu.memory_space<semaphore_mem>>) attributes {dimension_semantics = [#tpu.dimension_semantics<parallel>], iteration_bounds = array<i64: 8>, scalar_prefetch = 0 : i64, scratch_operands = 1 : i64, tpu.core_type = #tpu.core_type<tc>, window_params = [{pipeline_mode = #tpu.pipeline_mode<synchronous>, transform_indices = @transform_0, window_bounds = array<i64: 2, 4, 128>}, {}, {}]} {
    %c2_i32 = arith.constant 2 : i32
    %0 = arith.muli %arg0, %c2_i32 : i32
    %1 = tpu.assume_multiple %0, 2 : i32
    %c0_i32 = arith.constant 0 : i32
    %c0_i32_0 = arith.constant 0 : i32
    %c0_i32_1 = arith.constant 0 : i32
    %2 = tpu.memref_slice %arg1[%c0_i32, %c0_i32_0, %c0_i32_1] : memref<2x4x128xf32, #tpu.memory_space<vmem>> -> memref<2x4x128xf32, #tpu.memory_space<vmem>>
    %c1_i32 = arith.constant 1 : i32
    %c0_i32_2 = arith.constant 0 : i32
    %3 = tpu.memref_slice %arg3[%1, %c1_i32, %c0_i32_2] : memref<16x16x128xf32, #tpu.memory_space<any>> -> memref<2x4x128xf32, #tpu.memory_space<any>>
    tpu.enqueue_dma source(%2 : memref<2x4x128xf32, #tpu.memory_space<vmem>>) target(%3 : memref<2x4x128xf32, #tpu.memory_space<any>>) target_semaphore(%arg4 : memref<!tpu.dma_semaphore, #tpu.memory_space<semaphore_mem>>)
    %c0_i32_3 = arith.constant 0 : i32
    %c0_i32_4 = arith.constant 0 : i32
    %c0_i32_5 = arith.constant 0 : i32
    %4 = tpu.memref_slice %arg1[%c0_i32_3, %c0_i32_4, %c0_i32_5] : memref<2x4x128xf32, #tpu.memory_space<vmem>> -> memref<2x4x128xf32, #tpu.memory_space<vmem>>
    %c1_i32_6 = arith.constant 1 : i32
    %c0_i32_7 = arith.constant 0 : i32
    %5 = tpu.memref_slice %arg3[%1, %c1_i32_6, %c0_i32_7] : memref<16x16x128xf32, #tpu.memory_space<any>> -> memref<2x4x128xf32, #tpu.memory_space<any>>
    tpu.wait_dma2 semaphore(%arg4 : memref<!tpu.dma_semaphore, #tpu.memory_space<semaphore_mem>>) src(%4 : memref<2x4x128xf32, #tpu.memory_space<vmem>>) dst(%5 : memref<2x4x128xf32, #tpu.memory_space<any>>)
    return
  }
  func.func @transform_0(%arg0: i32) -> (i32, i32, i32) {
    %c0_i32 = arith.constant 0 : i32
    %c0_i32_0 = arith.constant 0 : i32
    %c0_i32_1 = arith.constant 0 : i32
    %c0_i32_2 = arith.constant 0 : i32
    return %c0_i32, %c0_i32_0, %c0_i32_1 : i32, i32, i32
  }
}

</mosaic_0001>

<llo_original>
// kernel: tpu_custom_call.1
$region0: #{tpu_custom_call.1}
  #allocation0 [shape = 'u32[]', space=smem, size = 0x4, offset = 0x4, fixed_abs, tag = 'smem constant byte address 0x4 - core index']
  #allocation1 [shape = 'u32[144,128]{1,0:T(1,128)}', space=vmem, size = 0x12000, scoped, tag = 'internal scratch']
  #allocation2 [shape = 's32[1]{0}', space=sflag, size = 0x4, scoped, tag = 'scratch operand']
  #allocation3 [shape = 's32[]', space=sflag, size = 0x4, offset = 0, fixed_abs, tag = 'sflag constant byte address 0x0 - dummy sync flag']
  %s0 = inlined_call_operand.vmem [shape: f32[2,4,128], index: 0, kind: input, shape index: {}]
  %s1 = inlined_call_operand.hbm [shape: f32[16,16,128], index: 1, kind: input, shape index: {}, may-alias: {1,2}]
  %s2 = inlined_call_operand.hbm [shape: f32[16,16,128], index: 2, kind: output, shape index: {}, may-alias: {1,2}]
  %s3 = sld [smem:[#allocation0]]
  $region25: #{tpu_custom_call.1} parent=0
    _
  %s5 = ssub.s32 1, %s3
  %s6 = scalar_select 0, %s5, %s3
  loop: start=0, step=1, limit=9
  $region2: #{tpu_custom_call.1} parent=0 // loop_pre_header
    _
  $region3: #{tpu_custom_call.1} parent=0 // loop_header
    %s8 = sphi 0, %s12
    %p9 = scmp.ge.s32.totalorder %s8, 9
    %s15 = sphi 0, %s15
    %s17 = sphi 0, %s15
    %s25 = sphi 0, %s17
  $region4: #{tpu_custom_call.1} parent=0 // loop_header_branch
    %11 = sbr.rel (%p9) target = $region8
  $region5: #{tpu_custom_call.1} parent=0 // loop_body
    %s13 = ssub.s32 %s8, 1
    %s14 = sadd.s32 %s8, 1
    %s16 = sadd.s32 %s15, 1
    %p18 = scmp.eq.s32.totalorder %s8, 7
    %p19 = scmp.ne.s32.totalorder %s15, %s17
    %p20 = scmp.eq.s32.totalorder %s8, 0
    %p21 = por %p19, %p20
    %p22 = scmp.ne.s32.totalorder %s15, %s17
    %p23 = scmp.eq.s32.totalorder %s13, 7
    %p24 = por %p22, %p23
    %p26 = scmp.ne.s32.totalorder %s17, %s25
    %p27 = scmp.eq.s32.totalorder %s13, 0
    %p28 = por %p26, %p27
    %p29 = scmp.le.s32.totalorder 1, %s8
    // Predicated region
    $region9: #{tpu_custom_call.1} parent=5 // pred_check
      %p30 = pneg %p29
    $region10: #{tpu_custom_call.1} parent=5 // pred_check_branch
      %32 = sbr.rel (%p30) target = $region12
    $region11: #{tpu_custom_call.1} parent=5 // pred_region
      %s33 = ssub.s32 %s8, 1
      // Predicated region
      $region13: #{tpu_custom_call.1} parent=11 // pred_check
        %p34 = pneg %p28
      $region14: #{tpu_custom_call.1} parent=11 // pred_check_branch
        %36 = sbr.rel (%p34) target = $region16
      $region15: #{tpu_custom_call.1} parent=11 // pred_region
        _
      $region16: #{tpu_custom_call.1} parent=11 // pred_fallthru
        _
    $region12: #{tpu_custom_call.1} parent=5 // pred_fallthru
      _
    %p37 = scmp.lt.s32.totalorder %s8, 8
    // Predicated region
    $region17: #{tpu_custom_call.1} parent=5 // pred_check
      %p38 = pneg %p37
    $region18: #{tpu_custom_call.1} parent=5 // pred_check_branch
      %40 = sbr.rel (%p38) target = $region20
    $region19: #{tpu_custom_call.1} parent=5 // pred_region
      _
    $region20: #{tpu_custom_call.1} parent=5 // pred_fallthru
      _
    %p41 = scmp.le.s32.totalorder 1, %s8
    // Predicated region
    $region21: #{tpu_custom_call.1} parent=5 // pred_check
      %p42 = pneg %p41
    $region22: #{tpu_custom_call.1} parent=5 // pred_check_branch
      %44 = sbr.rel (%p42) target = $region24
    $region23: #{tpu_custom_call.1} parent=5 // pred_region
      %s45 = ssub.s32 %s8, 1
      %p46 = pneg %p28
      %p47 = pneg %p24
      %s48 = smul.u32 %s13, 2
      %s49 = smul.u32 %s48, 16
      %s50 = sadd.s32 1, %s49
      %s51 = smul.addr %s50, 16
      %s52 = scalar_lea.hbm %s2, %s51
      %s54 = sshll.u32 %s0, 4
      %s55 = int_to_ptr.vmem [resolvable:$true] %s54
      %57 = dma.vmem_to_hbm [thread:$0]  %s55, 128, %s52, [#allocation2], 64, 256, 4
      %s58 = smul.u32 2, 4
      %s59 = smul.u32 %s58, 1
      %s60 = sshll.u32 %s59, 4
      %61 = dma.done [#allocation2], %s60
    $region24: #{tpu_custom_call.1} parent=5 // pred_fallthru
      _
  $region6: #{tpu_custom_call.1} parent=0 // loop_footer
    %s12 = sadd.s32 1, %s8
  $region7: #{tpu_custom_call.1} parent=0 // loop_footer_branch
    %7 = sbr.rel target = $region3
  $region8: #{tpu_custom_call.1} parent=0 // loop_exit
    _
  %62 = vsyncmov [#allocation2]
  %s63 = vpop.sfrf %62
  %p64 = scmp.eq.s32.totalorder %s63, 0
  %p65 = pneg %p64
  %67 = shalt.err (%p65)

</llo_original>
